<compile_context>
chip_gen: v7x
topology: tpu7x:2x2x1
jax: 0.10.0
libtpu: 0.0.40
codegen_flags: <defaults>
</compile_context>

<pallas_src>
import math

import jax
import jax.numpy as jnp
from jax.experimental import pallas as pl
from jax.experimental.pallas import tpu as pltpu

# ---- model hyperparameters (small, consistent with the module) ----
B = 2          # batch
L = 8          # sequence length
D_MODEL = 32   # d_model
H = 4          # number of heads
D_K = D_MODEL // H
D_FF = 64      # feed-forward hidden dim
FF_PAD = 128   # FFN hidden dim zero-padded to a full 128-lane tile
QKV_PAD = 128  # fused QKV output zero-padded to a full 128-lane tile

LN_EPS = 1e-6
LN_ALPHA = 1.0   # nn.Parameter(torch.ones(1))  (default init)
LN_BIAS = 0.0    # nn.Parameter(torch.zeros(1)) (default init)

NEG_INF = -1e9   # masked_fill value for float32

# ---- row offsets inside the packed "data" slab (width = D_MODEL) ----
ROW_X = 0                      # (B*L, D_MODEL) input tokens
ROW_MASK = ROW_X + B * L       # (H*L, L) keep-mask tiled per head (cols >= L are 0)
ROW_HM = ROW_MASK + H * L      # (H*L, D_MODEL) head-lane selector (0/1)
DATA_ROWS = ROW_HM + H * L     # 80

# ---- row offsets inside the packed "weights" slab (width = 128) ----
ROW_WQKV = 0                   # (D_MODEL, 128): [Wq | Wk | Wv | 0]
ROW_WO = ROW_WQKV + D_MODEL    # (D_MODEL, 128): [Wo | 0]
ROW_W1 = ROW_WO + D_MODEL      # (D_MODEL, 128): [W1 | 0]
ROW_W2 = ROW_W1 + D_MODEL      # (FF_PAD, 128):  [[W2 | 0]; [0]]
ROW_B1 = ROW_W2 + FF_PAD       # (1, 128): [b1 | 0]
ROW_B2 = ROW_B1 + 1            # (1, 128): [b2 | 0]
W_ROWS = ROW_B2 + 1            # 226


def _layer_norm(t):
    """LayerNormalization.forward: scalar alpha/bias, unbiased std, /(std+eps).

    Sum and sum-of-squares are computed as two *independent* reductions so the
    two cross-lane reduces can overlap (perf review item)."""
    n = t.shape[-1]
    s1 = jnp.sum(t, axis=-1, keepdims=True)
    s2 = jnp.sum(t * t, axis=-1, keepdims=True)
    mean = s1 * (1.0 / n)
    var = jnp.maximum((s2 - s1 * mean) * (1.0 / (n - 1)), 0.0)   # unbiased, clamped
    std = jnp.sqrt(var)
    return LN_ALPHA * (t - mean) / (std + LN_EPS) + LN_BIAS


def encoder_block_kernel(data_ref, w_ref, out_ref):
    # ---- unpack the two input slabs (static ref slices, no extra DMAs) ----
    x = data_ref[ROW_X:ROW_X + B * L, :]                        # (B*L, D)
    keep = data_ref[ROW_MASK:ROW_MASK + H * L, 0:L]             # (H*L, L) 1 = keep
    hm = data_ref[ROW_HM:ROW_HM + H * L, :]                     # (H*L, D) head-lane 0/1

    wqkv = w_ref[ROW_WQKV:ROW_WQKV + D_MODEL, :]                # (D, 128) [Wq|Wk|Wv|0]
    wo = w_ref[ROW_WO:ROW_WO + D_MODEL, 0:D_MODEL]              # (D, D)
    w1 = w_ref[ROW_W1:ROW_W1 + D_MODEL, :]                      # (D, 128) [W1|0]
    w2 = w_ref[ROW_W2:ROW_W2 + FF_PAD, 0:D_MODEL]               # (128, D) rows >= D_FF are 0
    b1 = w_ref[ROW_B1:ROW_B1 + 1, :]                            # (1, 128) [b1|0]
    b2 = w_ref[ROW_B2:ROW_B2 + 1, 0:D_MODEL]                    # (1, D)

    # ---- residual connection 0: pre-norm multi-head self-attention ----
    y = _layer_norm(x)                                          # (B*L, D)
    # Fused, 128-lane-dense QKV projection over all B*L token rows at once.
    qkv = jnp.dot(y, wqkv, preferred_element_type=jnp.float32)  # (B*L, 128)
    q = qkv[:, 0:D_MODEL] * (1.0 / math.sqrt(D_K))              # pre-scaled queries
    k = qkv[:, D_MODEL:2 * D_MODEL]
    v = qkv[:, 2 * D_MODEL:3 * D_MODEL]
    q3 = q.reshape(B, L, D_MODEL)                               # sublane-group split
    k3 = k.reshape(B, L, D_MODEL)
    v3 = v.reshape(B, L, D_MODEL)

    # Stack all H heads along the QUERY-ROW axis: row h*L + l carries token l's
    # query with only head h's lanes kept (hm).  This replaces the old 4-way
    # unrolled per-head loop with ONE batched score matmul, ONE softmax chain
    # and ONE attention*V matmul (single leading batch dim in each einsum).
    qg = (q3[:, None, :, :] * hm.reshape(H, L, D_MODEL)).reshape(B, H * L, D_MODEL)
    s = jnp.einsum("bqd,bkd->bqk", qg, k3,
                   preferred_element_type=jnp.float32)          # (B, H*L, L)
    # Exact masked_fill semantics of the reference (mask == 0 -> -1e9).
    s = jnp.where(keep == 0.0, NEG_INF, s)
    s = s - jnp.max(s, axis=-1, keepdims=True)                  # stable softmax
    p = jnp.exp(s)
    p = p / jnp.sum(p, axis=-1, keepdims=True)                  # exact divide
    og = jnp.einsum("bqk,bkd->bqd", p, v3,
                    preferred_element_type=jnp.float32)         # (B, H*L, D)

    # Recombine heads: after masking, each head's row block occupies disjoint
    # lanes, so "concat heads" degenerates to three vector adds (no lane
    # concatenate / relayout), followed by a single Wo matmul.
    og = og * hm
    attn = og[:, 0:L, :]
    for hh in range(1, H):                                      # 3 cheap VALU adds
        attn = attn + og[:, hh * L:(hh + 1) * L, :]
    attn = attn.reshape(B * L, D_MODEL)
    attn_out = jnp.dot(attn, wo, preferred_element_type=jnp.float32)
    x1 = x + attn_out                                           # residual (dropout = identity)

    # ---- residual connection 1: pre-norm feed-forward ----
    y2 = _layer_norm(x1)
    h1 = jnp.dot(y2, w1, preferred_element_type=jnp.float32) + b1    # (B*L, 128)
    h1 = jnp.maximum(h1, 0.0)                                   # relu; padded lanes stay 0
    ffn = jnp.dot(h1, w2, preferred_element_type=jnp.float32) + b2   # (B*L, D)

    out_ref[...] = x1 + ffn


def encoder_block(x, mask2d, params):
    """x: (B, L, D_MODEL) f32; mask2d: (L, L) f32 {0,1}; params: dict of weights."""
    x2d = x.reshape(B * L, D_MODEL)

    # ---- data slab: tokens + per-head tiled keep-mask + head-lane selector ----
    keep = jnp.tile(mask2d.astype(jnp.float32), (H, 1))               # (H*L, L)
    keep_pad = jnp.zeros((H * L, D_MODEL), jnp.float32).at[:, :L].set(keep)
    headmask = jnp.kron(jnp.eye(H, dtype=jnp.float32),
                        jnp.ones((1, D_K), jnp.float32))              # (H, D)
    hm_rows = jnp.repeat(headmask, L, axis=0)                         # (H*L, D)
    data = jnp.concatenate([x2d, keep_pad, hm_rows], axis=0)          # (DATA_ROWS, D)

    # ---- weight slab: one contiguous, 128-lane-dense block ----
    def pad(a, rows, cols=128):
        return jnp.zeros((rows, cols), jnp.float32).at[:a.shape[0], :a.shape[1]].set(a)

    wqkv = jnp.concatenate([params["wq"], params["wk"], params["wv"]], axis=1)
    w_slab = jnp.concatenate([
        pad(wqkv, D_MODEL),           # rows   0: 32  [Wq|Wk|Wv|0]
        pad(params["wo"], D_MODEL),   # rows  32: 64  [Wo|0]
        pad(params["w1"], D_MODEL),   # rows  64: 96  [W1|0]
        pad(params["w2"], FF_PAD),    # rows  96:224  [[W2|0];[0]]
        pad(params["b1"], 1),         # row  224      [b1|0]
        pad(params["b2"], 1),         # row  225      [b2|0]
    ], axis=0)                                                        # (W_ROWS, 128)

    full = lambda shape: pl.BlockSpec(shape, lambda i: (0,) * len(shape))

    out2d = pl.pallas_call(
        encoder_block_kernel,
        out_shape=jax.ShapeDtypeStruct((B * L, D_MODEL), jnp.float32),
        grid_spec=pltpu.PrefetchScalarGridSpec(
            num_scalar_prefetch=0,
            grid=(1,),                            # single invocation: whole batch
            in_specs=[
                full((DATA_ROWS, D_MODEL)),       # packed data slab   (1 DMA)
                full((W_ROWS, 128)),              # packed weight slab (1 DMA)
            ],
            out_specs=full((B * L, D_MODEL)),
        ),
        compiler_params=pltpu.CompilerParams(
            dimension_semantics=("arbitrary",)),
    )(data, w_slab)
    return out2d.reshape(B, L, D_MODEL)


def reference_encoder_block(x, mask2d, params):
    """Pure-JAX mirror of the PyTorch EncoderBlock forward (eval mode)."""
    def ln(t):
        mean = jnp.mean(t, axis=-1, keepdims=True)
        var = jnp.sum((t - mean) ** 2, axis=-1, keepdims=True) / (t.shape[-1] - 1)
        std = jnp.sqrt(var)
        return LN_ALPHA * (t - mean) / (std + LN_EPS) + LN_BIAS

    wq, wk, wv, wo = params["wq"], params["wk"], params["wv"], params["wo"]
    w1, b1, w2, b2 = params["w1"], params["b1"], params["w2"], params["b2"]

    y = ln(x)
    q = (y @ wq).reshape(B, L, H, D_K).transpose(0, 2, 1, 3)   # (B,H,L,d_k)
    k = (y @ wk).reshape(B, L, H, D_K).transpose(0, 2, 1, 3)
    v = (y @ wv).reshape(B, L, H, D_K).transpose(0, 2, 1, 3)
    scores = jnp.einsum("bhqd,bhkd->bhqk", q, k) / math.sqrt(D_K)
    scores = jnp.where(mask2d == 0.0, NEG_INF, scores)          # masked_fill
    probs = jax.nn.softmax(scores, axis=-1)
    o = jnp.einsum("bhqk,bhkd->bhqd", probs, v)
    o = o.transpose(0, 2, 1, 3).reshape(B, L, D_MODEL)
    x1 = x + o @ wo

    y2 = ln(x1)
    ffn = jnp.maximum(y2 @ w1 + b1[0], 0.0) @ w2 + b2[0]
    return x1 + ffn


def init_params(key):
    ks = jax.random.split(key, 8)
    u = lambda k, shape, fan_in: jax.random.uniform(
        k, shape, jnp.float32, -1.0 / math.sqrt(fan_in), 1.0 / math.sqrt(fan_in))
    # Weights stored as (in, out) — i.e. transpose of nn.Linear.weight.
    return {
        "wq": u(ks[0], (D_MODEL, D_MODEL), D_MODEL),
        "wk": u(ks[1], (D_MODEL, D_MODEL), D_MODEL),
        "wv": u(ks[2], (D_MODEL, D_MODEL), D_MODEL),
        "wo": u(ks[3], (D_MODEL, D_MODEL), D_MODEL),
        "w1": u(ks[4], (D_MODEL, D_FF), D_MODEL),
        "b1": u(ks[5], (1, D_FF), D_MODEL),
        "w2": u(ks[6], (D_FF, D_MODEL), D_FF),
        "b2": u(ks[7], (1, D_MODEL), D_FF),
    }


if __name__ == "__main__":
    key = jax.random.PRNGKey(0)
    k_x, k_p = jax.random.split(key)

    x = jax.random.normal(k_x, (B, L, D_MODEL), dtype=jnp.float32)
    params = init_params(k_p)

    # src_mask equivalent to a torch mask of shape (1, 1, L, L):
    # last two key positions are padding (masked out).
    mask2d = jnp.broadcast_to(
        (jnp.arange(L) < L - 2).astype(jnp.float32), (L, L))

    out = encoder_block(x, mask2d, params)
    out = jax.block_until_ready(out)

    ref = reference_encoder_block(x, mask2d, params)
    assert out.shape == (B, L, D_MODEL)
    # Exact softmax divide and exact masked_fill semantics: only tiny f32 /
    # MXU rounding differences remain vs. the pure-JAX reference.
    assert jnp.allclose(out, ref, rtol=1e-3, atol=1e-3), (
        float(jnp.max(jnp.abs(out - ref))))

    print("KERNEL_OK")
</pallas_src>

<mosaic_0001>
module attributes {stable_mosaic.version = 11 : i64} {
  func.func @encoder_block_kernel(%arg0: i32, %arg1: memref<80x32xf32, #tpu.memory_space<vmem>>, %arg2: memref<226x128xf32, #tpu.memory_space<vmem>>, %arg3: memref<16x32xf32, #tpu.memory_space<vmem>>) attributes {dimension_semantics = [#tpu.dimension_semantics<arbitrary>], iteration_bounds = array<i64: 1>, scalar_prefetch = 0 : i64, scratch_operands = 0 : i64, tpu.core_type = #tpu.core_type<tc>, window_params = [{pipeline_mode = #tpu.pipeline_mode<synchronous>, transform_indices = @transform_0, window_bounds = array<i64: 80, 32>}, {pipeline_mode = #tpu.pipeline_mode<synchronous>, transform_indices = @transform_1, window_bounds = array<i64: 226, 128>}, {pipeline_mode = #tpu.pipeline_mode<synchronous>, transform_indices = @transform_2, window_bounds = array<i64: 16, 32>}]} {
    %c0 = arith.constant 0 : index
    %c0_0 = arith.constant 0 : index
    %0 = vector.load %arg1[%c0, %c0_0] : memref<80x32xf32, #tpu.memory_space<vmem>>, vector<16x32xf32>
    %c16 = arith.constant 16 : index
    %c0_1 = arith.constant 0 : index
    %1 = vector.load %arg1[%c16, %c0_1] : memref<80x32xf32, #tpu.memory_space<vmem>>, vector<32x8xf32>
    %c48 = arith.constant 48 : index
    %c0_2 = arith.constant 0 : index
    %2 = vector.load %arg1[%c48, %c0_2] : memref<80x32xf32, #tpu.memory_space<vmem>>, vector<32x32xf32>
    %c0_3 = arith.constant 0 : index
    %c0_4 = arith.constant 0 : index
    %3 = vector.load %arg2[%c0_3, %c0_4] : memref<226x128xf32, #tpu.memory_space<vmem>>, vector<32x128xf32>
    %c32 = arith.constant 32 : index
    %c0_5 = arith.constant 0 : index
    %4 = vector.load %arg2[%c32, %c0_5] : memref<226x128xf32, #tpu.memory_space<vmem>>, vector<32x32xf32>
    %c64 = arith.constant 64 : index
    %c0_6 = arith.constant 0 : index
    %5 = vector.load %arg2[%c64, %c0_6] : memref<226x128xf32, #tpu.memory_space<vmem>>, vector<32x128xf32>
    %c96 = arith.constant 96 : index
    %c0_7 = arith.constant 0 : index
    %6 = vector.load %arg2[%c96, %c0_7] : memref<226x128xf32, #tpu.memory_space<vmem>>, vector<128x32xf32>
    %c224 = arith.constant 224 : index
    %c0_8 = arith.constant 0 : index
    %7 = vector.load %arg2[%c224, %c0_8] : memref<226x128xf32, #tpu.memory_space<vmem>>, vector<1x128xf32>
    %c225 = arith.constant 225 : index
    %c0_9 = arith.constant 0 : index
    %8 = vector.load %arg2[%c225, %c0_9] : memref<226x128xf32, #tpu.memory_space<vmem>>, vector<1x32xf32>
    %cst = arith.constant dense<0.000000e+00> : vector<16xf32>
    %9 = vector.multi_reduction <add>, %0, %cst [1] : vector<16x32xf32> to vector<16xf32>
    %10 = vector.shape_cast %9 : vector<16xf32> to vector<16x1xf32>
    %11 = arith.mulf %0, %0 : vector<16x32xf32>
    %cst_10 = arith.constant dense<0.000000e+00> : vector<16xf32>
    %12 = vector.multi_reduction <add>, %11, %cst_10 [1] : vector<16x32xf32> to vector<16xf32>
    %13 = vector.shape_cast %12 : vector<16xf32> to vector<16x1xf32>
    %cst_11 = arith.constant 3.125000e-02 : f32
    %14 = vector.broadcast %cst_11 : f32 to vector<16x1xf32>
    %15 = arith.mulf %10, %14 : vector<16x1xf32>
    %16 = arith.mulf %10, %15 : vector<16x1xf32>
    %17 = arith.subf %13, %16 : vector<16x1xf32>
    %cst_12 = arith.constant 0.0322580636 : f32
    %18 = vector.broadcast %cst_12 : f32 to vector<16x1xf32>
    %19 = arith.mulf %17, %18 : vector<16x1xf32>
    %cst_13 = arith.constant 0.000000e+00 : f32
    %20 = vector.broadcast %cst_13 : f32 to vector<16x1xf32>
    %21 = arith.maximumf %19, %20 : vector<16x1xf32>
    %22 = math.sqrt %21 : vector<16x1xf32>
    %23 = vector.broadcast %15 : vector<16x1xf32> to vector<16x32xf32>
    %24 = arith.subf %0, %23 : vector<16x32xf32>
    %cst_14 = arith.constant 1.000000e+00 : f32
    %25 = vector.broadcast %cst_14 : f32 to vector<16x32xf32>
    %26 = arith.mulf %25, %24 : vector<16x32xf32>
    %cst_15 = arith.constant 9.99999997E-7 : f32
    %27 = vector.broadcast %cst_15 : f32 to vector<16x1xf32>
    %28 = arith.addf %22, %27 : vector<16x1xf32>
    %29 = vector.broadcast %28 : vector<16x1xf32> to vector<16x32xf32>
    %30 = arith.divf %26, %29 : vector<16x32xf32>
    %cst_16 = arith.constant 0.000000e+00 : f32
    %31 = vector.broadcast %cst_16 : f32 to vector<16x32xf32>
    %32 = arith.addf %30, %31 : vector<16x32xf32>
    %cst_17 = arith.constant dense<0.000000e+00> : vector<16x128xf32>
    %33 = tpu.matmul %32, %3, %cst_17 {dimension_numbers = #tpu.dot_dimension_numbers<[1], [0], [0], [1], [0, 0, 1, 1], [], []>} : vector<16x32xf32>, vector<32x128xf32>, vector<16x128xf32> -> vector<16x128xf32>
    %34 = vector.extract_strided_slice %33 {offsets = [0, 0], sizes = [16, 32], strides = [1, 1]} : vector<16x128xf32> to vector<16x32xf32>
    %cst_18 = arith.constant 0.353553385 : f32
    %35 = vector.broadcast %cst_18 : f32 to vector<16x32xf32>
    %36 = arith.mulf %34, %35 : vector<16x32xf32>
    %37 = vector.extract_strided_slice %33 {offsets = [0, 32], sizes = [16, 32], strides = [1, 1]} : vector<16x128xf32> to vector<16x32xf32>
    %38 = vector.extract_strided_slice %33 {offsets = [0, 64], sizes = [16, 32], strides = [1, 1]} : vector<16x128xf32> to vector<16x32xf32>
    %39 = vector.shape_cast %36 : vector<16x32xf32> to vector<2x8x32xf32>
    %40 = vector.shape_cast %37 : vector<16x32xf32> to vector<2x8x32xf32>
    %41 = vector.shape_cast %38 : vector<16x32xf32> to vector<2x8x32xf32>
    %42 = vector.shape_cast %39 : vector<2x8x32xf32> to vector<2x1x8x32xf32>
    %43 = vector.shape_cast %2 : vector<32x32xf32> to vector<4x8x32xf32>
    %44 = vector.shape_cast %43 : vector<4x8x32xf32> to vector<1x4x8x32xf32>
    %45 = vector.broadcast %42 : vector<2x1x8x32xf32> to vector<2x4x8x32xf32>
    %46 = vector.broadcast %44 : vector<1x4x8x32xf32> to vector<2x4x8x32xf32>
    %47 = arith.mulf %45, %46 : vector<2x4x8x32xf32>
    %48 = vector.shape_cast %47 : vector<2x4x8x32xf32> to vector<2x32x32xf32>
    "tpu.trace_start"() <{level = 10 : i32, message = "bqd,bkd->bqk"}> : () -> ()
    %cst_19 = arith.constant dense<0.000000e+00> : vector<2x32x8xf32>
    %49 = tpu.matmul %48, %40, %cst_19 {dimension_numbers = #tpu.dot_dimension_numbers<[2], [2], [1], [1], [0, 0, 0, 1, 1, 1], [0], [0]>} : vector<2x32x32xf32>, vector<2x8x32xf32>, vector<2x32x8xf32> -> vector<2x32x8xf32>
    %cst_20 = arith.constant 0.000000e+00 : f32
    "tpu.trace_stop"() : () -> ()
    %50 = vector.broadcast %cst_20 : f32 to vector<32x8xf32>
    %51 = arith.cmpf oeq, %1, %50 : vector<32x8xf32>
    %cst_21 = arith.constant -1.000000e+09 : f32
    %52 = vector.shape_cast %51 : vector<32x8xi1> to vector<1x32x8xi1>
    %53 = vector.broadcast %52 : vector<1x32x8xi1> to vector<2x32x8xi1>
    %54 = vector.broadcast %cst_21 : f32 to vector<2x32x8xf32>
    %55 = arith.select %53, %54, %49 : vector<2x32x8xi1>, vector<2x32x8xf32>
    %cst_22 = arith.constant dense<0xFF800000> : vector<2x32xf32>
    %56 = vector.multi_reduction <maximumf>, %55, %cst_22 [2] : vector<2x32x8xf32> to vector<2x32xf32>
    %57 = vector.shape_cast %56 : vector<2x32xf32> to vector<2x32x1xf32>
    %58 = vector.broadcast %57 : vector<2x32x1xf32> to vector<2x32x8xf32>
    %59 = arith.subf %55, %58 : vector<2x32x8xf32>
    %60 = math.exp %59 : vector<2x32x8xf32>
    %cst_23 = arith.constant dense<0.000000e+00> : vector<2x32xf32>
    %61 = vector.multi_reduction <add>, %60, %cst_23 [2] : vector<2x32x8xf32> to vector<2x32xf32>
    %62 = vector.shape_cast %61 : vector<2x32xf32> to vector<2x32x1xf32>
    %63 = vector.broadcast %62 : vector<2x32x1xf32> to vector<2x32x8xf32>
    %64 = arith.divf %60, %63 : vector<2x32x8xf32>
    "tpu.trace_start"() <{level = 10 : i32, message = "bqk,bkd->bqd"}> : () -> ()
    %cst_24 = arith.constant dense<0.000000e+00> : vector<2x32x32xf32>
    %65 = tpu.matmul %64, %41, %cst_24 {dimension_numbers = #tpu.dot_dimension_numbers<[2], [1], [1], [2], [0, 0, 0, 1, 1, 2], [0], [0]>} : vector<2x32x8xf32>, vector<2x8x32xf32>, vector<2x32x32xf32> -> vector<2x32x32xf32>
    "tpu.trace_stop"() : () -> ()
    %66 = vector.shape_cast %2 : vector<32x32xf32> to vector<1x32x32xf32>
    %67 = vector.broadcast %66 : vector<1x32x32xf32> to vector<2x32x32xf32>
    %68 = arith.mulf %65, %67 : vector<2x32x32xf32>
    %69 = vector.extract_strided_slice %68 {offsets = [0, 0, 0], sizes = [2, 8, 32], strides = [1, 1, 1]} : vector<2x32x32xf32> to vector<2x8x32xf32>
    %70 = vector.extract_strided_slice %68 {offsets = [0, 8, 0], sizes = [2, 8, 32], strides = [1, 1, 1]} : vector<2x32x32xf32> to vector<2x8x32xf32>
    %71 = arith.addf %69, %70 : vector<2x8x32xf32>
    %72 = vector.extract_strided_slice %68 {offsets = [0, 16, 0], sizes = [2, 8, 32], strides = [1, 1, 1]} : vector<2x32x32xf32> to vector<2x8x32xf32>
    %73 = arith.addf %71, %72 : vector<2x8x32xf32>
    %74 = vector.extract_strided_slice %68 {offsets = [0, 24, 0], sizes = [2, 8, 32], strides = [1, 1, 1]} : vector<2x32x32xf32> to vector<2x8x32xf32>
    %75 = arith.addf %73, %74 : vector<2x8x32xf32>
    %76 = vector.shape_cast %75 : vector<2x8x32xf32> to vector<16x32xf32>
    %cst_25 = arith.constant dense<0.000000e+00> : vector<16x32xf32>
    %77 = tpu.matmul %76, %4, %cst_25 {dimension_numbers = #tpu.dot_dimension_numbers<[1], [0], [0], [1], [0, 0, 1, 1], [], []>} : vector<16x32xf32>, vector<32x32xf32>, vector<16x32xf32> -> vector<16x32xf32>
    %78 = arith.addf %0, %77 : vector<16x32xf32>
    %cst_26 = arith.constant dense<0.000000e+00> : vector<16xf32>
    %79 = vector.multi_reduction <add>, %78, %cst_26 [1] : vector<16x32xf32> to vector<16xf32>
    %80 = vector.shape_cast %79 : vector<16xf32> to vector<16x1xf32>
    %81 = arith.mulf %78, %78 : vector<16x32xf32>
    %cst_27 = arith.constant dense<0.000000e+00> : vector<16xf32>
    %82 = vector.multi_reduction <add>, %81, %cst_27 [1] : vector<16x32xf32> to vector<16xf32>
    %83 = vector.shape_cast %82 : vector<16xf32> to vector<16x1xf32>
    %cst_28 = arith.constant 3.125000e-02 : f32
    %84 = vector.broadcast %cst_28 : f32 to vector<16x1xf32>
    %85 = arith.mulf %80, %84 : vector<16x1xf32>
    %86 = arith.mulf %80, %85 : vector<16x1xf32>
    %87 = arith.subf %83, %86 : vector<16x1xf32>
    %cst_29 = arith.constant 0.0322580636 : f32
    %88 = vector.broadcast %cst_29 : f32 to vector<16x1xf32>
    %89 = arith.mulf %87, %88 : vector<16x1xf32>
    %cst_30 = arith.constant 0.000000e+00 : f32
    %90 = vector.broadcast %cst_30 : f32 to vector<16x1xf32>
    %91 = arith.maximumf %89, %90 : vector<16x1xf32>
    %92 = math.sqrt %91 : vector<16x1xf32>
    %93 = vector.broadcast %85 : vector<16x1xf32> to vector<16x32xf32>
    %94 = arith.subf %78, %93 : vector<16x32xf32>
    %cst_31 = arith.constant 1.000000e+00 : f32
    %95 = vector.broadcast %cst_31 : f32 to vector<16x32xf32>
    %96 = arith.mulf %95, %94 : vector<16x32xf32>
    %cst_32 = arith.constant 9.99999997E-7 : f32
    %97 = vector.broadcast %cst_32 : f32 to vector<16x1xf32>
    %98 = arith.addf %92, %97 : vector<16x1xf32>
    %99 = vector.broadcast %98 : vector<16x1xf32> to vector<16x32xf32>
    %100 = arith.divf %96, %99 : vector<16x32xf32>
    %cst_33 = arith.constant 0.000000e+00 : f32
    %101 = vector.broadcast %cst_33 : f32 to vector<16x32xf32>
    %102 = arith.addf %100, %101 : vector<16x32xf32>
    %cst_34 = arith.constant dense<0.000000e+00> : vector<16x128xf32>
    %103 = tpu.matmul %102, %5, %cst_34 {dimension_numbers = #tpu.dot_dimension_numbers<[1], [0], [0], [1], [0, 0, 1, 1], [], []>} : vector<16x32xf32>, vector<32x128xf32>, vector<16x128xf32> -> vector<16x128xf32>
    %104 = vector.broadcast %7 : vector<1x128xf32> to vector<16x128xf32>
    %105 = arith.addf %103, %104 : vector<16x128xf32>
    %cst_35 = arith.constant 0.000000e+00 : f32
    %106 = vector.broadcast %cst_35 : f32 to vector<16x128xf32>
    %107 = arith.maximumf %105, %106 : vector<16x128xf32>
    %cst_36 = arith.constant dense<0.000000e+00> : vector<16x32xf32>
    %108 = tpu.matmul %107, %6, %cst_36 {dimension_numbers = #tpu.dot_dimension_numbers<[1], [0], [0], [1], [0, 0, 1, 1], [], []>} : vector<16x128xf32>, vector<128x32xf32>, vector<16x32xf32> -> vector<16x32xf32>
    %109 = vector.broadcast %8 : vector<1x32xf32> to vector<16x32xf32>
    %110 = arith.addf %108, %109 : vector<16x32xf32>
    %111 = arith.addf %78, %110 : vector<16x32xf32>
    %c0_37 = arith.constant 0 : index
    %c0_38 = arith.constant 0 : index
    %112 = vector.load %arg3[%c0_37, %c0_38] : memref<16x32xf32, #tpu.memory_space<vmem>>, vector<16x32xf32>
    tpu.vector_store %arg3[%c0_37, %c0_38], %111 {strides = array<i32>} : memref<16x32xf32, #tpu.memory_space<vmem>>, vector<16x32xf32>,
    return
  }
  func.func @transform_0(%arg0: i32) -> (i32, i32) {
    %c0_i32 = arith.constant 0 : i32
    %c0_i32_0 = arith.constant 0 : i32
    %c0_i32_1 = arith.constant 0 : i32
    return %c0_i32, %c0_i32_0 : i32, i32
  }
  func.func @transform_1(%arg0: i32) -> (i32, i32) {
    %c0_i32 = arith.constant 0 : i32
    %c0_i32_0 = arith.constant 0 : i32
    %c0_i32_1 = arith.constant 0 : i32
    return %c0_i32, %c0_i32_0 : i32, i32
  }
  func.func @transform_2(%arg0: i32) -> (i32, i32) {
    %c0_i32 = arith.constant 0 : i32
    %c0_i32_0 = arith.constant 0 : i32
    %c0_i32_1 = arith.constant 0 : i32
    return %c0_i32, %c0_i32_0 : i32, i32
  }
}

</mosaic_0001>

<llo_original>
// kernel: tpu_custom_call.1
$region0: #{tpu_custom_call.1}
  #allocation0 [shape = 'u32[]', space=smem, size = 0x4, offset = 0x4, fixed_abs, tag = 'smem constant byte address 0x4 - core index']
  #allocation1 [shape = 'u32[144,128]{1,0:T(1,128)}', space=vmem, size = 0x12000, scoped, tag = 'internal scratch']
  %s0 = inlined_call_operand.vmem [shape: f32[80,32], index: 0, kind: input, shape index: {}]
  %s1 = inlined_call_operand.hbm [shape: f32[226,128], index: 1, kind: input, shape index: {}]
  %s2 = inlined_call_operand.hbm [shape: f32[16,32], index: 2, kind: output, shape index: {}]
  %s3 = sld [smem:[#allocation0]]
  $region22: #{tpu_custom_call.1} parent=0
    _
  %s5 = ssub.s32 1, %s3
  %s6 = scalar_select 0, %s5, %s3
  $region1: #{tpu_custom_call.1} parent=0
    #allocation2 [shape = 'u8[118784]{0}', space=vmem, size = 0x1d000, scoped, tag = 'input window, operand 1, single buffered']
    #allocation3 [shape = 's32[1]{0}', space=sflag, size = 0x4, scoped, tag = 'scoped memory for tpu_custom_call.1']
    #allocation4 [shape = 's32[1]{0}', space=sflag, size = 0x4, scoped, tag = 'scoped memory for tpu_custom_call.1']
    #allocation5 [shape = 'u8[8192]{0}', space=vmem, size = 0x2000, scoped, tag = 'output window, operand 0, single buffered']
    %7 = vsyncpa [#allocation3], 0
    %8 = vsyncpa [#allocation4], 0
    // Predicated region
    $region2: #{tpu_custom_call.1} parent=1 // pred_check
      _
    $region3: #{tpu_custom_call.1} parent=1 // pred_check_branch
      %10 = sbr.rel (0) target = $region5
    $region4: #{tpu_custom_call.1} parent=1 // pred_region
      _
    $region5: #{tpu_custom_call.1} parent=1 // pred_fallthru
      _
    // Predicated region
    $region6: #{tpu_custom_call.1} parent=1 // pred_check
      _
    $region7: #{tpu_custom_call.1} parent=1 // pred_check_branch
      %12 = sbr.rel (0) target = $region9
    $region8: #{tpu_custom_call.1} parent=1 // pred_region
      %s14 = ssub.s32 3712, 3712
      %15 = vsyncadd [#allocation3], %s14
      %s16 = sshll.u32 [#allocation2], 4
      %s17 = int_to_ptr.vmem [resolvable:$true] %s16
      %22 = dma.hbm_to_vmem [thread:$0]  %s1, 3712, %s17, [#allocation3], 128, 128, 8
    $region9: #{tpu_custom_call.1} parent=1 // pred_fallthru
      _
    // Predicated region
    $region10: #{tpu_custom_call.1} parent=1 // pred_check
      _
    $region11: #{tpu_custom_call.1} parent=1 // pred_check_branch
      %24 = sbr.rel (0) target = $region13
    $region12: #{tpu_custom_call.1} parent=1 // pred_region
      %25 = dma.done [#allocation3], 3712
    $region13: #{tpu_custom_call.1} parent=1 // pred_fallthru
      _
    %v26 = vld [vmem:[%s0] sm:$0xff]
    %v27 = vld [vmem:[%s0 + $0x8] sm:$0xff]
    %v28 = vld [vmem:[%s0 + $0x10] sm:$0xff]
    %v29 = vld [vmem:[%s0 + $0x18] sm:$0xff]
    %v30 = vld [vmem:[%s0 + $0x20] sm:$0xff]
    %v31 = vld [vmem:[%s0 + $0x28] sm:$0xff]
    %v32 = vld [vmem:[%s0 + $0x30] sm:$0xff]
    %v33 = vld [vmem:[%s0 + $0x38] sm:$0xff]
    %v34 = vld [vmem:[%s0 + $0x40] sm:$0xff]
    %v35 = vld [vmem:[%s0 + $0x48] sm:$0xff]
    %v36 = vld [vmem:[#allocation2] sm:$0xff]
    %v37 = vld [vmem:[#allocation2 + $0x8] sm:$0xff]
    %v38 = vld [vmem:[#allocation2 + $0x10] sm:$0xff]
    %v39 = vld [vmem:[#allocation2 + $0x18] sm:$0xff]
    %v40 = vld [vmem:[#allocation2 + $0x20] sm:$0xff]
    %v41 = vld [vmem:[#allocation2 + $0x28] sm:$0xff]
    %v42 = vld [vmem:[#allocation2 + $0x30] sm:$0xff]
    %v43 = vld [vmem:[#allocation2 + $0x38] sm:$0xff]
    %v44 = vld [vmem:[#allocation2 + $0x40] sm:$0xff]
    %v45 = vld [vmem:[#allocation2 + $0x48] sm:$0xff]
    %v46 = vld [vmem:[#allocation2 + $0x50] sm:$0xff]
    %v47 = vld [vmem:[#allocation2 + $0x58] sm:$0xff]
    %v48 = vld [vmem:[#allocation2 + $0x60] sm:$0xff]
    %v49 = vld [vmem:[#allocation2 + $0x68] sm:$0xff]
    %v50 = vld [vmem:[#allocation2 + $0x70] sm:$0xff]
    %v51 = vld [vmem:[#allocation2 + $0x78] sm:$0xff]
    %v52 = vld [vmem:[#allocation2 + $0x80] sm:$0xff]
    %v53 = vld [vmem:[#allocation2 + $0x88] sm:$0xff]
    %v54 = vld [vmem:[#allocation2 + $0x90] sm:$0xff]
    %v55 = vld [vmem:[#allocation2 + $0x98] sm:$0xff]
    %v56 = vld [vmem:[#allocation2 + $0xa0] sm:$0xff]
    %v57 = vld [vmem:[#allocation2 + $0xa8] sm:$0xff]
    %v58 = vld [vmem:[#allocation2 + $0xb0] sm:$0xff]
    %v59 = vld [vmem:[#allocation2 + $0xb8] sm:$0xff]
    %v60 = vld [vmem:[#allocation2 + $0xc0] sm:$0xff]
    %v61 = vld [vmem:[#allocation2 + $0xc8] sm:$0xff]
    %v62 = vld [vmem:[#allocation2 + $0xd0] sm:$0xff]
    %v63 = vld [vmem:[#allocation2 + $0xd8] sm:$0xff]
    %v64 = vld [vmem:[#allocation2 + $0xe0] sm:$0x1]
    %v65 = vld [vmem:[#allocation2 + $0xe1] sm:$0x1]
    %vm66 = vcmask 261120
    %v67 = vsel %vm66, %v26, 0.0
    %68 = vadd.xlane.f32.xlu0 %v67
    %v69 = vpop.xlane.xlu0 %68
    %v70 = vsel %vm66, %v27, 0.0
    %71 = vadd.xlane.f32.xlu0 %v70
    %v72 = vpop.xlane.xlu0 %71
    %v73 = vmul.f32 %v26, %v26
    %v74 = vmul.f32 %v27, %v27
    %v75 = vsel %vm66, %v73, 0.0
    %76 = vadd.xlane.f32.xlu0 %v75
    %v77 = vpop.xlane.xlu0 %76
    %v78 = vsel %vm66, %v74, 0.0
    %79 = vadd.xlane.f32.xlu0 %v78
    %v80 = vpop.xlane.xlu0 %79
    %v81 = vmul.f32 %v69, 0.03125
    %v82 = vmul.f32 %v72, 0.03125
    %v83 = vmul.f32 %v69, %v81
    %v84 = vmul.f32 %v72, %v82
    %v85 = vsub.f32 %v77, %v83
    %v86 = vsub.f32 %v80, %v84
    %v87 = vmul.f32 %v85, 0.032258064
    %v88 = vmul.f32 %v86, 0.032258064
    %v89 = vmax.f32 %v87, 0.0
    %v90 = vmax.f32 %v88, 0.0
    %v91 = vrsqrt.pop %v89
    %v92 = vmul.f32 %v89, %v91
    %vm93 = vcmp.eq.f32.partialorder %v89, inf
    %v94 = vsel %vm93, %v89, %v92
    %vm95 = vcmp.eq.f32.partialorder %v89, 0.0
    %v96 = vand.u32 %v89, 2147483648
    %v97 = vsel %vm95, %v96, %v94
    %v98 = vrsqrt.pop %v90
    %v99 = vmul.f32 %v90, %v98
    %vm100 = vcmp.eq.f32.partialorder %v90, inf
    %v101 = vsel %vm100, %v90, %v99
    %vm102 = vcmp.eq.f32.partialorder %v90, 0.0
    %v103 = vand.u32 %v90, 2147483648
    %v104 = vsel %vm102, %v103, %v101
    %v105 = vsub.f32 %v26, %v81
    %v106 = vsub.f32 %v27, %v82
    %v107 = vadd.f32 %v97, 1e-06
    %v108 = vadd.f32 %v104, 1e-06
    %v109 = vrcp.pop %v107
    %v110 = vmul.f32 %v105, %v109
    %v111 = vrcp.pop %v108
    %v112 = vmul.f32 %v106, %v111
    %v113 = vadd.f32 %v110, 0.0
    %v114 = vadd.f32 %v112, 0.0
    %v116 = vsel %vm66, %v113, 0
    %v119 = vsel %vm66, %v114, 0
    %121 = vmatprep.subr.mxu0 0.0
    %122 = vmatpush1.msra.mxu0 %v36
    %123 = vmatprep.subr.mxu0 0.0
    %124 = vmatpush1.msra.mxu0 %v37
    %125 = vmatprep.subr.mxu0 0.0
    %126 = vmatpush1.msra.mxu0 %v38
    %127 = vmatprep.subr.mxu0 0.0
    %128 = vmatpush1.msra.mxu0 %v39
    %129 = vmatprep.subr.mxu0 0.0
    %130 = vmatpush1.msra.mxu0 0.0
    %131 = vmatprep.subr.mxu0 0.0
    %132 = vmatpush1.msra.mxu0 0.0
    %133 = vmatprep.subr.mxu0 0.0
    %134 = vmatpush1.msra.mxu0 0.0
    %135 = vmatprep.subr.mxu0 0.0
    %136 = vmatpush1.msra.mxu0 0.0
    %137 = vmatprep.subr.mxu0 0.0
    %138 = vmatpush1.msra.mxu0 0.0
    %139 = vmatprep.subr.mxu0 0.0
    %140 = vmatpush1.msra.mxu0 0.0
    %141 = vmatprep.subr.mxu0 0.0
    %142 = vmatpush1.msra.mxu0 0.0
    %143 = vmatprep.subr.mxu0 0.0
    %144 = vmatpush1.msra.mxu0 0.0
    %145 = vmatprep.subr.mxu0 0.0
    %146 = vmatpush1.msra.mxu0 0.0
    %147 = vmatprep.subr.mxu0 0.0
    %148 = vmatpush1.msra.mxu0 0.0
    %149 = vmatprep.subr.mxu0 0.0
    %150 = vmatpush1.msra.mxu0 0.0
    %151 = vmatprep.subr.mxu0 0.0
    %152 = vmatpush1.msra.mxu0 0.0
    %153 = vmatprep.subr.mxu0 0.0
    %154 = vmatpush1.msra.mxu0 0.0
    %155 = vmatprep.subr.mxu0 0.0
    %156 = vmatpush1.msra.mxu0 0.0
    %157 = vmatprep.subr.mxu0 0.0
    %158 = vmatpush1.msra.mxu0 0.0
    %159 = vmatprep.subr.mxu0 0.0
    %160 = vmatpush1.msra.mxu0 0.0
    %161 = vmatprep.subr.mxu0 0.0
    %162 = vmatpush1.msra.mxu0 0.0
    %163 = vmatprep.subr.mxu0 0.0
    %164 = vmatpush1.msra.mxu0 0.0
    %165 = vmatprep.subr.mxu0 0.0
    %166 = vmatpush1.msra.mxu0 0.0
    %167 = vmatprep.subr.mxu0 0.0
    %168 = vmatpush1.msra.mxu0 0.0
    %169 = vmatprep.subr.mxu0 0.0
    %170 = vmatpush1.msra.mxu0 0.0
    %171 = vmatprep.subr.mxu0 0.0
    %172 = vmatpush1.msra.mxu0 0.0
    %173 = vmatprep.subr.mxu0 0.0
    %174 = vmatpush1.msra.mxu0 0.0
    %175 = vmatprep.subr.mxu0 0.0
    %176 = vmatpush1.msra.mxu0 0.0
    %177 = vmatprep.subr.mxu0 0.0
    %178 = vmatpush1.msra.mxu0 0.0
    %179 = vmatprep.subr.mxu0 0.0
    %180 = vmatpush1.msra.mxu0 0.0
    %181 = vmatprep.subr.mxu0 0.0
    %182 = vmatpush1.msra.mxu0 0.0
    %183 = vmatprep.subr.mxu0 0.0
    %184 = vmatpush1.msra.mxu0 0.0
    %185 = vmatprep.mubr.f32.mxu0 0.0
    %186 = vmatmul.mubr.f32.gmra.mrb[0].mxu0 %v116
    %v187 = vpop.f32.mrb[0].mxu0
    %v188 = vadd.f32 0.0, %v187
    %v189 = vpop.f32.mrb[0].mxu0
    %190 = vmatprep.mubr.f32.mxu0 0.0
    %191 = vmatmul.mubr.f32.gmra.mrb[0].mxu0 %v119
    %v192 = vpop.f32.mrb[0].mxu0
    %v193 = vadd.f32 0.0, %v192
    %v194 = vpop.f32.mrb[0].mxu0
    %195 = vdwg.mxu0
    %v196 = vmul.f32 %v188, 0.35355338
    %v197 = vmul.f32 %v193, 0.35355338
    %v198 = vmul.f32 %v196, %v32
    %v199 = vmul.f32 %v196, %v33
    %v200 = vmul.f32 %v196, %v34
    %v201 = vmul.f32 %v196, %v35
    %v202 = vmul.f32 %v197, %v32
    %v203 = vmul.f32 %v197, %v33
    %v204 = vmul.f32 %v197, %v34
    %v205 = vmul.f32 %v197, %v35
    %207 = vrot.lane.b32.xlu0 %v188, 96
    %v208 = vpop.permute.xlu0 %207
    %v210 = vsel %vm66, %v198, 0
    %v213 = vsel %vm66, %v199, 0
    %v216 = vsel %vm66, %v200, 0
    %v219 = vsel %vm66, %v201, 0
    %v221 = vsel %vm66, %v208, 0
    %223 = vmatprep.subr.mxu0 0.0
    %224 = vmatpush1.xpose.msra.mxu0 %v221
    %225 = vmatprep.subr.mxu0 0.0
    %226 = vmatpush1.xpose.msra.mxu0 0.0
    %227 = vmatprep.subr.mxu0 0.0
    %228 = vmatpush1.xpose.msra.mxu0 0.0
    %229 = vmatprep.subr.mxu0 0.0
    %230 = vmatpush1.xpose.msra.mxu0 0.0
    %231 = vmatprep.subr.mxu0 0.0
    %232 = vmatpush1.xpose.msra.mxu0 0.0
    %233 = vmatprep.subr.mxu0 0.0
    %234 = vmatpush1.xpose.msra.mxu0 0.0
    %235 = vmatprep.subr.mxu0 0.0
    %236 = vmatpush1.xpose.msra.mxu0 0.0
    %237 = vmatprep.subr.mxu0 0.0
    %238 = vmatpush1.xpose.msra.mxu0 0.0
    %239 = vmatprep.subr.mxu0 0.0
    %240 = vmatpush1.xpose.msra.mxu0 0.0
    %241 = vmatprep.subr.mxu0 0.0
    %242 = vmatpush1.xpose.msra.mxu0 0.0
    %243 = vmatprep.subr.mxu0 0.0
    %244 = vmatpush1.xpose.msra.mxu0 0.0
    %245 = vmatprep.subr.mxu0 0.0
    %246 = vmatpush1.xpose.msra.mxu0 0.0
    %247 = vmatprep.subr.mxu0 0.0
    %248 = vmatpush1.xpose.msra.mxu0 0.0
    %249 = vmatprep.subr.mxu0 0.0
    %250 = vmatpush1.xpose.msra.mxu0 0.0
    %251 = vmatprep.subr.mxu0 0.0
    %252 = vmatpush1.xpose.msra.mxu0 0.0
    %253 = vmatprep.subr.mxu0 0.0
    %254 = vmatpush1.xpose.msra.mxu0 0.0
    %255 = vmatprep.subr.mxu0 0.0
    %256 = vmatpush1.xpose.msra.mxu0 0.0
    %257 = vmatprep.subr.mxu0 0.0
    %258 = vmatpush1.xpose.msra.mxu0 0.0
    %259 = vmatprep.subr.mxu0 0.0
    %260 = vmatpush1.xpose.msra.mxu0 0.0
    %261 = vmatprep.subr.mxu0 0.0
    %262 = vmatpush1.xpose.msra.mxu0 0.0
    %263 = vmatprep.subr.mxu0 0.0
    %264 = vmatpush1.xpose.msra.mxu0 0.0
    %265 = vmatprep.subr.mxu0 0.0
    %266 = vmatpush1.xpose.msra.mxu0 0.0
    %267 = vmatprep.subr.mxu0 0.0
    %268 = vmatpush1.xpose.msra.mxu0 0.0
    %269 = vmatprep.subr.mxu0 0.0
    %270 = vmatpush1.xpose.msra.mxu0 0.0
    %271 = vmatprep.subr.mxu0 0.0
    %272 = vmatpush1.xpose.msra.mxu0 0.0
    %273 = vmatprep.subr.mxu0 0.0
    %274 = vmatpush1.xpose.msra.mxu0 0.0
    %275 = vmatprep.subr.mxu0 0.0
    %276 = vmatpush1.xpose.msra.mxu0 0.0
    %277 = vmatprep.subr.mxu0 0.0
    %278 = vmatpush1.xpose.msra.mxu0 0.0
    %279 = vmatprep.subr.mxu0 0.0
    %280 = vmatpush1.xpose.msra.mxu0 0.0
    %281 = vmatprep.subr.mxu0 0.0
    %282 = vmatpush1.xpose.msra.mxu0 0.0
    %283 = vmatprep.subr.mxu0 0.0
    %284 = vmatpush1.xpose.msra.mxu0 0.0
    %285 = vmatprep.subr.mxu0 0.0
    %286 = vmatpush1.xpose.msra.mxu0 0.0
    %287 = vmatprep.mubr.f32.mxu0 0.0
    %288 = vmatmul.mubr.f32.gmra.mrb[0].mxu0 %v210
    %v289 = vpop.f32.mrb[0].mxu0
    %v290 = vadd.f32 0.0, %v289
    %v291 = vpop.f32.mrb[0].mxu0
    %292 = vmatprep.mubr.f32.mxu0 0.0
    %293 = vmatmul.mubr.f32.gmra.mrb[0].mxu0 %v213
    %v294 = vpop.f32.mrb[0].mxu0
    %v295 = vadd.f32 0.0, %v294
    %v296 = vpop.f32.mrb[0].mxu0
    %297 = vmatprep.mubr.f32.mxu0 0.0
    %298 = vmatmul.mubr.f32.gmra.mrb[0].mxu0 %v216
    %v299 = vpop.f32.mrb[0].mxu0
    %v300 = vadd.f32 0.0, %v299
    %v301 = vpop.f32.mrb[0].mxu0
    %302 = vmatprep.mubr.f32.mxu0 0.0
    %303 = vmatmul.mubr.f32.gmra.mrb[0].mxu0 %v219
    %v304 = vpop.f32.mrb[0].mxu0
    %v305 = vadd.f32 0.0, %v304
    %v306 = vpop.f32.mrb[0].mxu0
    %307 = vdwg.mxu0
    %309 = vrot.lane.b32.xlu0 %v193, 96
    %v310 = vpop.permute.xlu0 %309
    %v312 = vsel %vm66, %v202, 0
    %v315 = vsel %vm66, %v203, 0
    %v318 = vsel %vm66, %v204, 0
    %v321 = vsel %vm66, %v205, 0
    %v323 = vsel %vm66, %v310, 0
    %325 = vmatprep.subr.mxu0 0.0
    %326 = vmatpush1.xpose.msra.mxu0 %v323
    %327 = vmatprep.subr.mxu0 0.0
    %328 = vmatpush1.xpose.msra.mxu0 0.0
    %329 = vmatprep.subr.mxu0 0.0
    %330 = vmatpush1.xpose.msra.mxu0 0.0
    %331 = vmatprep.subr.mxu0 0.0
    %332 = vmatpush1.xpose.msra.mxu0 0.0
    %333 = vmatprep.subr.mxu0 0.0
    %334 = vmatpush1.xpose.msra.mxu0 0.0
    %335 = vmatprep.subr.mxu0 0.0
    %336 = vmatpush1.xpose.msra.mxu0 0.0
    %337 = vmatprep.subr.mxu0 0.0
    %338 = vmatpush1.xpose.msra.mxu0 0.0
    %339 = vmatprep.subr.mxu0 0.0
    %340 = vmatpush1.xpose.msra.mxu0 0.0
    %341 = vmatprep.subr.mxu0 0.0
    %342 = vmatpush1.xpose.msra.mxu0 0.0
    %343 = vmatprep.subr.mxu0 0.0
    %344 = vmatpush1.xpose.msra.mxu0 0.0
    %345 = vmatprep.subr.mxu0 0.0
    %346 = vmatpush1.xpose.msra.mxu0 0.0
    %347 = vmatprep.subr.mxu0 0.0
    %348 = vmatpush1.xpose.msra.mxu0 0.0
    %349 = vmatprep.subr.mxu0 0.0
    %350 = vmatpush1.xpose.msra.mxu0 0.0
    %351 = vmatprep.subr.mxu0 0.0
    %352 = vmatpush1.xpose.msra.mxu0 0.0
    %353 = vmatprep.subr.mxu0 0.0
    %354 = vmatpush1.xpose.msra.mxu0 0.0
    %355 = vmatprep.subr.mxu0 0.0
    %356 = vmatpush1.xpose.msra.mxu0 0.0
    %357 = vmatprep.subr.mxu0 0.0
    %358 = vmatpush1.xpose.msra.mxu0 0.0
    %359 = vmatprep.subr.mxu0 0.0
    %360 = vmatpush1.xpose.msra.mxu0 0.0
    %361 = vmatprep.subr.mxu0 0.0
    %362 = vmatpush1.xpose.msra.mxu0 0.0
    %363 = vmatprep.subr.mxu0 0.0
    %364 = vmatpush1.xpose.msra.mxu0 0.0
    %365 = vmatprep.subr.mxu0 0.0
    %366 = vmatpush1.xpose.msra.mxu0 0.0
    %367 = vmatprep.subr.mxu0 0.0
    %368 = vmatpush1.xpose.msra.mxu0 0.0
    %369 = vmatprep.subr.mxu0 0.0
    %370 = vmatpush1.xpose.msra.mxu0 0.0
    %371 = vmatprep.subr.mxu0 0.0
    %372 = vmatpush1.xpose.msra.mxu0 0.0
    %373 = vmatprep.subr.mxu0 0.0
    %374 = vmatpush1.xpose.msra.mxu0 0.0
    %375 = vmatprep.subr.mxu0 0.0
    %376 = vmatpush1.xpose.msra.mxu0 0.0
    %377 = vmatprep.subr.mxu0 0.0
    %378 = vmatpush1.xpose.msra.mxu0 0.0
    %379 = vmatprep.subr.mxu0 0.0
    %380 = vmatpush1.xpose.msra.mxu0 0.0
    %381 = vmatprep.subr.mxu0 0.0
    %382 = vmatpush1.xpose.msra.mxu0 0.0
    %383 = vmatprep.subr.mxu0 0.0
    %384 = vmatpush1.xpose.msra.mxu0 0.0
    %385 = vmatprep.subr.mxu0 0.0
    %386 = vmatpush1.xpose.msra.mxu0 0.0
    %387 = vmatprep.subr.mxu0 0.0
    %388 = vmatpush1.xpose.msra.mxu0 0.0
    %389 = vmatprep.mubr.f32.mxu0 0.0
    %390 = vmatmul.mubr.f32.gmra.mrb[0].mxu0 %v312
    %v391 = vpop.f32.mrb[0].mxu0
    %v392 = vadd.f32 0.0, %v391
    %v393 = vpop.f32.mrb[0].mxu0
    %394 = vmatprep.mubr.f32.mxu0 0.0
    %395 = vmatmul.mubr.f32.gmra.mrb[0].mxu0 %v315
    %v396 = vpop.f32.mrb[0].mxu0
    %v397 = vadd.f32 0.0, %v396
    %v398 = vpop.f32.mrb[0].mxu0
    %399 = vmatprep.mubr.f32.mxu0 0.0
    %400 = vmatmul.mubr.f32.gmra.mrb[0].mxu0 %v318
    %v401 = vpop.f32.mrb[0].mxu0
    %v402 = vadd.f32 0.0, %v401
    %v403 = vpop.f32.mrb[0].mxu0
    %404 = vmatprep.mubr.f32.mxu0 0.0
    %405 = vmatmul.mubr.f32.gmra.mrb[0].mxu0 %v321
    %v406 = vpop.f32.mrb[0].mxu0
    %v407 = vadd.f32 0.0, %v406
    %v408 = vpop.f32.mrb[0].mxu0
    %409 = vdwg.mxu0
    %vm410 = vcmp.eq.f32.partialorder %v28, 0.0
    %vm411 = vcmp.eq.f32.partialorder %v29, 0.0
    %vm412 = vcmp.eq.f32.partialorder %v30, 0.0
    %vm413 = vcmp.eq.f32.partialorder %v31, 0.0
    %v414 = vsel %vm410, 1, 0
    %v415 = vsel %vm411, 1, 0
    %v416 = vsel %vm412, 1, 0
    %v417 = vsel %vm413, 1, 0
    %vm418 = vcmp.eq.s32.totalorder %v414, 1
    %vm419 = vcmp.eq.s32.totalorder %v415, 1
    %vm420 = vcmp.eq.s32.totalorder %v416, 1
    %vm421 = vcmp.eq.s32.totalorder %v417, 1
    %v422 = vsel %vm418, -1e+09, %v290
    %v423 = vsel %vm419, -1e+09, %v295
    %v424 = vsel %vm420, -1e+09, %v300
    %v425 = vsel %vm421, -1e+09, %v305
    %v426 = vsel %vm418, -1e+09, %v392
    %v427 = vsel %vm419, -1e+09, %v397
    %v428 = vsel %vm420, -1e+09, %v402
    %v429 = vsel %vm421, -1e+09, %v407
    %vm430 = vcmask 64512
    %v431 = vsel %vm430, %v422, -inf
    %432 = vmax.xlane.f32.xlu0 %v431
    %v433 = vpop.xlane.xlu0 %432
    %v434 = vsel %vm430, %v423, -inf
    %435 = vmax.xlane.f32.xlu0 %v434
    %v436 = vpop.xlane.xlu0 %435
    %v437 = vsel %vm430, %v424, -inf
    %438 = vmax.xlane.f32.xlu0 %v437
    %v439 = vpop.xlane.xlu0 %438
    %v440 = vsel %vm430, %v425, -inf
    %441 = vmax.xlane.f32.xlu0 %v440
    %v442 = vpop.xlane.xlu0 %441
    %v443 = vsel %vm430, %v426, -inf
    %444 = vmax.xlane.f32.xlu0 %v443
    %v445 = vpop.xlane.xlu0 %444
    %v446 = vsel %vm430, %v427, -inf
    %447 = vmax.xlane.f32.xlu0 %v446
    %v448 = vpop.xlane.xlu0 %447
    %v449 = vsel %vm430, %v428, -inf
    %450 = vmax.xlane.f32.xlu0 %v449
    %v451 = vpop.xlane.xlu0 %450
    %v452 = vsel %vm430, %v429, -inf
    %453 = vmax.xlane.f32.xlu0 %v452
    %v454 = vpop.xlane.xlu0 %453
    %v455 = vsub.f32 %v422, %v433
    %v456 = vsub.f32 %v423, %v436
    %v457 = vsub.f32 %v424, %v439
    %v458 = vsub.f32 %v425, %v442
    %v459 = vsub.f32 %v426, %v445
    %v460 = vsub.f32 %v427, %v448
    %v461 = vsub.f32 %v428, %v451
    %v462 = vsub.f32 %v429, %v454
    %v463 = vmul.f32 %v455, 1.442695
    %v464 = vpow.pop %v463
    %v465 = vmul.f32 %v456, 1.442695
    %v466 = vpow.pop %v465
    %v467 = vmul.f32 %v457, 1.442695
    %v468 = vpow.pop %v467
    %v469 = vmul.f32 %v458, 1.442695
    %v470 = vpow.pop %v469
    %v471 = vmul.f32 %v459, 1.442695
    %v472 = vpow.pop %v471
    %v473 = vmul.f32 %v460, 1.442695
    %v474 = vpow.pop %v473
    %v475 = vmul.f32 %v461, 1.442695
    %v476 = vpow.pop %v475
    %v477 = vmul.f32 %v462, 1.442695
    %v478 = vpow.pop %v477
    %v479 = vsel %vm430, %v464, 0.0
    %480 = vadd.xlane.f32.xlu0 %v479
    %v481 = vpop.xlane.xlu0 %480
    %v482 = vsel %vm430, %v466, 0.0
    %483 = vadd.xlane.f32.xlu0 %v482
    %v484 = vpop.xlane.xlu0 %483
    %v485 = vsel %vm430, %v468, 0.0
    %486 = vadd.xlane.f32.xlu0 %v485
    %v487 = vpop.xlane.xlu0 %486
    %v488 = vsel %vm430, %v470, 0.0
    %489 = vadd.xlane.f32.xlu0 %v488
    %v490 = vpop.xlane.xlu0 %489
    %v491 = vsel %vm430, %v472, 0.0
    %492 = vadd.xlane.f32.xlu0 %v491
    %v493 = vpop.xlane.xlu0 %492
    %v494 = vsel %vm430, %v474, 0.0
    %495 = vadd.xlane.f32.xlu0 %v494
    %v496 = vpop.xlane.xlu0 %495
    %v497 = vsel %vm430, %v476, 0.0
    %498 = vadd.xlane.f32.xlu0 %v497
    %v499 = vpop.xlane.xlu0 %498
    %v500 = vsel %vm430, %v478, 0.0
    %501 = vadd.xlane.f32.xlu0 %v500
    %v502 = vpop.xlane.xlu0 %501
    %v503 = vrcp.pop %v481
    %v504 = vmul.f32 %v464, %v503
    %v505 = vrcp.pop %v484
    %v506 = vmul.f32 %v466, %v505
    %v507 = vrcp.pop %v487
    %v508 = vmul.f32 %v468, %v507
    %v509 = vrcp.pop %v490
    %v510 = vmul.f32 %v470, %v509
    %v511 = vrcp.pop %v493
    %v512 = vmul.f32 %v472, %v511
    %v513 = vrcp.pop %v496
    %v514 = vmul.f32 %v474, %v513
    %v515 = vrcp.pop %v499
    %v516 = vmul.f32 %v476, %v515
    %v517 = vrcp.pop %v502
    %v518 = vmul.f32 %v478, %v517
    %519 = vrot.lane.b32.xlu0 %v188, 64
    %v520 = vpop.permute.xlu0 %519
    %v523 = vsel %vm430, %v504, 0
    %v526 = vsel %vm430, %v506, 0
    %v529 = vsel %vm430, %v508, 0
    %v532 = vsel %vm430, %v510, 0
    %534 = vmatprep.subr.mxu0 0.0
    %535 = vmatpush1.msra.mxu0 %v520
    %536 = vmatprep.subr.mxu0 0.0
    %537 = vmatpush1.msra.mxu0 0.0
    %538 = vmatprep.subr.mxu0 0.0
    %539 = vmatpush1.msra.mxu0 0.0
    %540 = vmatprep.subr.mxu0 0.0
    %541 = vmatpush1.msra.mxu0 0.0
    %542 = vmatprep.subr.mxu0 0.0
    %543 = vmatpush1.msra.mxu0 0.0
    %544 = vmatprep.subr.mxu0 0.0
    %545 = vmatpush1.msra.mxu0 0.0
    %546 = vmatprep.subr.mxu0 0.0
    %547 = vmatpush1.msra.mxu0 0.0
    %548 = vmatprep.subr.mxu0 0.0
    %549 = vmatpush1.msra.mxu0 0.0
    %550 = vmatprep.subr.mxu0 0.0
    %551 = vmatpush1.msra.mxu0 0.0
    %552 = vmatprep.subr.mxu0 0.0
    %553 = vmatpush1.msra.mxu0 0.0
    %554 = vmatprep.subr.mxu0 0.0
    %555 = vmatpush1.msra.mxu0 0.0
    %556 = vmatprep.subr.mxu0 0.0
    %557 = vmatpush1.msra.mxu0 0.0
    %558 = vmatprep.subr.mxu0 0.0
    %559 = vmatpush1.msra.mxu0 0.0
    %560 = vmatprep.subr.mxu0 0.0
    %561 = vmatpush1.msra.mxu0 0.0
    %562 = vmatprep.subr.mxu0 0.0
    %563 = vmatpush1.msra.mxu0 0.0
    %564 = vmatprep.subr.mxu0 0.0
    %565 = vmatpush1.msra.mxu0 0.0
    %566 = vmatprep.subr.mxu0 0.0
    %567 = vmatpush1.msra.mxu0 0.0
    %568 = vmatprep.subr.mxu0 0.0
    %569 = vmatpush1.msra.mxu0 0.0
    %570 = vmatprep.subr.mxu0 0.0
    %571 = vmatpush1.msra.mxu0 0.0
    %572 = vmatprep.subr.mxu0 0.0
    %573 = vmatpush1.msra.mxu0 0.0
    %574 = vmatprep.subr.mxu0 0.0
    %575 = vmatpush1.msra.mxu0 0.0
    %576 = vmatprep.subr.mxu0 0.0
    %577 = vmatpush1.msra.mxu0 0.0
    %578 = vmatprep.subr.mxu0 0.0
    %579 = vmatpush1.msra.mxu0 0.0
    %580 = vmatprep.subr.mxu0 0.0
    %581 = vmatpush1.msra.mxu0 0.0
    %582 = vmatprep.subr.mxu0 0.0
    %583 = vmatpush1.msra.mxu0 0.0
    %584 = vmatprep.subr.mxu0 0.0
    %585 = vmatpush1.msra.mxu0 0.0
    %586 = vmatprep.subr.mxu0 0.0
    %587 = vmatpush1.msra.mxu0 0.0
    %588 = vmatprep.subr.mxu0 0.0
    %589 = vmatpush1.msra.mxu0 0.0
    %590 = vmatprep.subr.mxu0 0.0
    %591 = vmatpush1.msra.mxu0 0.0
    %592 = vmatprep.subr.mxu0 0.0
    %593 = vmatpush1.msra.mxu0 0.0
    %594 = vmatprep.subr.mxu0 0.0
    %595 = vmatpush1.msra.mxu0 0.0
    %596 = vmatprep.subr.mxu0 0.0
    %597 = vmatpush1.msra.mxu0 0.0
    %598 = vmatprep.mubr.f32.mxu0 0.0
    %599 = vmatmul.mubr.f32.gmra.mrb[0].mxu0 %v523
    %v600 = vpop.f32.mrb[0].mxu0
    %v601 = vadd.f32 0.0, %v600
    %v602 = vpop.f32.mrb[0].mxu0
    %603 = vmatprep.mubr.f32.mxu0 0.0
    %604 = vmatmul.mubr.f32.gmra.mrb[0].mxu0 %v526
    %v605 = vpop.f32.mrb[0].mxu0
    %v606 = vadd.f32 0.0, %v605
    %v607 = vpop.f32.mrb[0].mxu0
    %608 = vmatprep.mubr.f32.mxu0 0.0
    %609 = vmatmul.mubr.f32.gmra.mrb[0].mxu0 %v529
    %v610 = vpop.f32.mrb[0].mxu0
    %v611 = vadd.f32 0.0, %v610
    %v612 = vpop.f32.mrb[0].mxu0
    %613 = vmatprep.mubr.f32.mxu0 0.0
    %614 = vmatmul.mubr.f32.gmra.mrb[0].mxu0 %v532
    %v615 = vpop.f32.mrb[0].mxu0
    %v616 = vadd.f32 0.0, %v615
    %v617 = vpop.f32.mrb[0].mxu0
    %618 = vdwg.mxu0
    %619 = vrot.lane.b32.xlu0 %v193, 64
    %v620 = vpop.permute.xlu0 %619
    %v623 = vsel %vm430, %v512, 0
    %v626 = vsel %vm430, %v514, 0
    %v629 = vsel %vm430, %v516, 0
    %v632 = vsel %vm430, %v518, 0
    %634 = vmatprep.subr.mxu0 0.0
    %635 = vmatpush1.msra.mxu0 %v620
    %636 = vmatprep.subr.mxu0 0.0
    %637 = vmatpush1.msra.mxu0 0.0
    %638 = vmatprep.subr.mxu0 0.0
    %639 = vmatpush1.msra.mxu0 0.0
    %640 = vmatprep.subr.mxu0 0.0
    %641 = vmatpush1.msra.mxu0 0.0
    %642 = vmatprep.subr.mxu0 0.0
    %643 = vmatpush1.msra.mxu0 0.0
    %644 = vmatprep.subr.mxu0 0.0
    %645 = vmatpush1.msra.mxu0 0.0
    %646 = vmatprep.subr.mxu0 0.0
    %647 = vmatpush1.msra.mxu0 0.0
    %648 = vmatprep.subr.mxu0 0.0
    %649 = vmatpush1.msra.mxu0 0.0
    %650 = vmatprep.subr.mxu0 0.0
    %651 = vmatpush1.msra.mxu0 0.0
    %652 = vmatprep.subr.mxu0 0.0
    %653 = vmatpush1.msra.mxu0 0.0
    %654 = vmatprep.subr.mxu0 0.0
    %655 = vmatpush1.msra.mxu0 0.0
    %656 = vmatprep.subr.mxu0 0.0
    %657 = vmatpush1.msra.mxu0 0.0
    %658 = vmatprep.subr.mxu0 0.0
    %659 = vmatpush1.msra.mxu0 0.0
    %660 = vmatprep.subr.mxu0 0.0
    %661 = vmatpush1.msra.mxu0 0.0
    %662 = vmatprep.subr.mxu0 0.0
    %663 = vmatpush1.msra.mxu0 0.0
    %664 = vmatprep.subr.mxu0 0.0
    %665 = vmatpush1.msra.mxu0 0.0
    %666 = vmatprep.subr.mxu0 0.0
    %667 = vmatpush1.msra.mxu0 0.0
    %668 = vmatprep.subr.mxu0 0.0
    %669 = vmatpush1.msra.mxu0 0.0
    %670 = vmatprep.subr.mxu0 0.0
    %671 = vmatpush1.msra.mxu0 0.0
    %672 = vmatprep.subr.mxu0 0.0
    %673 = vmatpush1.msra.mxu0 0.0
    %674 = vmatprep.subr.mxu0 0.0
    %675 = vmatpush1.msra.mxu0 0.0
    %676 = vmatprep.subr.mxu0 0.0
    %677 = vmatpush1.msra.mxu0 0.0
    %678 = vmatprep.subr.mxu0 0.0
    %679 = vmatpush1.msra.mxu0 0.0
    %680 = vmatprep.subr.mxu0 0.0
    %681 = vmatpush1.msra.mxu0 0.0
    %682 = vmatprep.subr.mxu0 0.0
    %683 = vmatpush1.msra.mxu0 0.0
    %684 = vmatprep.subr.mxu0 0.0
    %685 = vmatpush1.msra.mxu0 0.0
    %686 = vmatprep.subr.mxu0 0.0
    %687 = vmatpush1.msra.mxu0 0.0
    %688 = vmatprep.subr.mxu0 0.0
    %689 = vmatpush1.msra.mxu0 0.0
    %690 = vmatprep.subr.mxu0 0.0
    %691 = vmatpush1.msra.mxu0 0.0
    %692 = vmatprep.subr.mxu0 0.0
    %693 = vmatpush1.msra.mxu0 0.0
    %694 = vmatprep.subr.mxu0 0.0
    %695 = vmatpush1.msra.mxu0 0.0
    %696 = vmatprep.subr.mxu0 0.0
    %697 = vmatpush1.msra.mxu0 0.0
    %698 = vmatprep.mubr.f32.mxu0 0.0
    %699 = vmatmul.mubr.f32.gmra.mrb[0].mxu0 %v623
    %v700 = vpop.f32.mrb[0].mxu0
    %v701 = vadd.f32 0.0, %v700
    %v702 = vpop.f32.mrb[0].mxu0
    %703 = vmatprep.mubr.f32.mxu0 0.0
    %704 = vmatmul.mubr.f32.gmra.mrb[0].mxu0 %v626
    %v705 = vpop.f32.mrb[0].mxu0
    %v706 = vadd.f32 0.0, %v705
    %v707 = vpop.f32.mrb[0].mxu0
    %708 = vmatprep.mubr.f32.mxu0 0.0
    %709 = vmatmul.mubr.f32.gmra.mrb[0].mxu0 %v629
    %v710 = vpop.f32.mrb[0].mxu0
    %v711 = vadd.f32 0.0, %v710
    %v712 = vpop.f32.mrb[0].mxu0
    %713 = vmatprep.mubr.f32.mxu0 0.0
    %714 = vmatmul.mubr.f32.gmra.mrb[0].mxu0 %v632
    %v715 = vpop.f32.mrb[0].mxu0
    %v716 = vadd.f32 0.0, %v715
    %v717 = vpop.f32.mrb[0].mxu0
    %718 = vdwg.mxu0
    %v719 = vmul.f32 %v601, %v32
    %v720 = vmul.f32 %v606, %v33
    %v721 = vmul.f32 %v611, %v34
    %v722 = vmul.f32 %v616, %v35
    %v723 = vmul.f32 %v701, %v32
    %v724 = vmul.f32 %v706, %v33
    %v725 = vmul.f32 %v711, %v34
    %v726 = vmul.f32 %v716, %v35
    %v727 = vadd.f32 %v719, %v720
    %v728 = vadd.f32 %v723, %v724
    %v729 = vadd.f32 %v727, %v721
    %v730 = vadd.f32 %v728, %v725
    %v731 = vadd.f32 %v729, %v722
    %v732 = vadd.f32 %v730, %v726
    %v734 = vsel %vm66, %v731, 0
    %v737 = vsel %vm66, %v732, 0
    %739 = vmatprep.subr.mxu0 0.0
    %740 = vmatpush1.msra.mxu0 %v40
    %741 = vmatprep.subr.mxu0 0.0
    %742 = vmatpush1.msra.mxu0 %v41
    %743 = vmatprep.subr.mxu0 0.0
    %744 = vmatpush1.msra.mxu0 %v42
    %745 = vmatprep.subr.mxu0 0.0
    %746 = vmatpush1.msra.mxu0 %v43
    %747 = vmatprep.subr.mxu0 0.0
    %748 = vmatpush1.msra.mxu0 0.0
    %749 = vmatprep.subr.mxu0 0.0
    %750 = vmatpush1.msra.mxu0 0.0
    %751 = vmatprep.subr.mxu0 0.0
    %752 = vmatpush1.msra.mxu0 0.0
    %753 = vmatprep.subr.mxu0 0.0
    %754 = vmatpush1.msra.mxu0 0.0
    %755 = vmatprep.subr.mxu0 0.0
    %756 = vmatpush1.msra.mxu0 0.0
    %757 = vmatprep.subr.mxu0 0.0
    %758 = vmatpush1.msra.mxu0 0.0
    %759 = vmatprep.subr.mxu0 0.0
    %760 = vmatpush1.msra.mxu0 0.0
    %761 = vmatprep.subr.mxu0 0.0
    %762 = vmatpush1.msra.mxu0 0.0
    %763 = vmatprep.subr.mxu0 0.0
    %764 = vmatpush1.msra.mxu0 0.0
    %765 = vmatprep.subr.mxu0 0.0
    %766 = vmatpush1.msra.mxu0 0.0
    %767 = vmatprep.subr.mxu0 0.0
    %768 = vmatpush1.msra.mxu0 0.0
    %769 = vmatprep.subr.mxu0 0.0
    %770 = vmatpush1.msra.mxu0 0.0
    %771 = vmatprep.subr.mxu0 0.0
    %772 = vmatpush1.msra.mxu0 0.0
    %773 = vmatprep.subr.mxu0 0.0
    %774 = vmatpush1.msra.mxu0 0.0
    %775 = vmatprep.subr.mxu0 0.0
    %776 = vmatpush1.msra.mxu0 0.0
    %777 = vmatprep.subr.mxu0 0.0
    %778 = vmatpush1.msra.mxu0 0.0
    %779 = vmatprep.subr.mxu0 0.0
    %780 = vmatpush1.msra.mxu0 0.0
    %781 = vmatprep.subr.mxu0 0.0
    %782 = vmatpush1.msra.mxu0 0.0
    %783 = vmatprep.subr.mxu0 0.0
    %784 = vmatpush1.msra.mxu0 0.0
    %785 = vmatprep.subr.mxu0 0.0
    %786 = vmatpush1.msra.mxu0 0.0
    %787 = vmatprep.subr.mxu0 0.0
    %788 = vmatpush1.msra.mxu0 0.0
    %789 = vmatprep.subr.mxu0 0.0
    %790 = vmatpush1.msra.mxu0 0.0
    %791 = vmatprep.subr.mxu0 0.0
    %792 = vmatpush1.msra.mxu0 0.0
    %793 = vmatprep.subr.mxu0 0.0
    %794 = vmatpush1.msra.mxu0 0.0
    %795 = vmatprep.subr.mxu0 0.0
    %796 = vmatpush1.msra.mxu0 0.0
    %797 = vmatprep.subr.mxu0 0.0
    %798 = vmatpush1.msra.mxu0 0.0
    %799 = vmatprep.subr.mxu0 0.0
    %800 = vmatpush1.msra.mxu0 0.0
    %801 = vmatprep.subr.mxu0 0.0
    %802 = vmatpush1.msra.mxu0 0.0
    %803 = vmatprep.mubr.f32.mxu0 0.0
    %804 = vmatmul.mubr.f32.gmra.mrb[0].mxu0 %v734
    %v805 = vpop.f32.mrb[0].mxu0
    %v806 = vadd.f32 0.0, %v805
    %v807 = vpop.f32.mrb[0].mxu0
    %808 = vmatprep.mubr.f32.mxu0 0.0
    %809 = vmatmul.mubr.f32.gmra.mrb[0].mxu0 %v737
    %v810 = vpop.f32.mrb[0].mxu0
    %v811 = vadd.f32 0.0, %v810
    %v812 = vpop.f32.mrb[0].mxu0
    %813 = vdwg.mxu0
    %v814 = vadd.f32 %v26, %v806
    %v815 = vadd.f32 %v27, %v811
    %v816 = vsel %vm66, %v814, 0.0
    %817 = vadd.xlane.f32.xlu0 %v816
    %v818 = vpop.xlane.xlu0 %817
    %v819 = vsel %vm66, %v815, 0.0
    %820 = vadd.xlane.f32.xlu0 %v819
    %v821 = vpop.xlane.xlu0 %820
    %v822 = vmul.f32 %v814, %v814
    %v823 = vmul.f32 %v815, %v815
    %v824 = vsel %vm66, %v822, 0.0
    %825 = vadd.xlane.f32.xlu0 %v824
    %v826 = vpop.xlane.xlu0 %825
    %v827 = vsel %vm66, %v823, 0.0
    %828 = vadd.xlane.f32.xlu0 %v827
    %v829 = vpop.xlane.xlu0 %828
    %v830 = vmul.f32 %v818, 0.03125
    %v831 = vmul.f32 %v821, 0.03125
    %v832 = vmul.f32 %v818, %v830
    %v833 = vmul.f32 %v821, %v831
    %v834 = vsub.f32 %v826, %v832
    %v835 = vsub.f32 %v829, %v833
    %v836 = vmul.f32 %v834, 0.032258064
    %v837 = vmul.f32 %v835, 0.032258064
    %v838 = vmax.f32 %v836, 0.0
    %v839 = vmax.f32 %v837, 0.0
    %v840 = vrsqrt.pop %v838
    %v841 = vmul.f32 %v838, %v840
    %vm842 = vcmp.eq.f32.partialorder %v838, inf
    %v843 = vsel %vm842, %v838, %v841
    %vm844 = vcmp.eq.f32.partialorder %v838, 0.0
    %v845 = vand.u32 %v838, 2147483648
    %v846 = vsel %vm844, %v845, %v843
    %v847 = vrsqrt.pop %v839
    %v848 = vmul.f32 %v839, %v847
    %vm849 = vcmp.eq.f32.partialorder %v839, inf
    %v850 = vsel %vm849, %v839, %v848
    %vm851 = vcmp.eq.f32.partialorder %v839, 0.0
    %v852 = vand.u32 %v839, 2147483648
    %v853 = vsel %vm851, %v852, %v850
    %v854 = vsub.f32 %v814, %v830
    %v855 = vsub.f32 %v815, %v831
    %v856 = vadd.f32 %v846, 1e-06
    %v857 = vadd.f32 %v853, 1e-06
    %v858 = vrcp.pop %v856
    %v859 = vmul.f32 %v854, %v858
    %v860 = vrcp.pop %v857
    %v861 = vmul.f32 %v855, %v860
    %v862 = vadd.f32 %v859, 0.0
    %v863 = vadd.f32 %v861, 0.0
    %v864 = vlaneseq
    %v865 = vshrl.u32 %v864, 7
    %v866 = vsub.s32 0, %v865
    %v867 = vrot.slane %v64, %v866
    %v869 = vsel %vm66, %v862, 0
    %v872 = vsel %vm66, %v863, 0
    %874 = vmatprep.subr.mxu0 0.0
    %875 = vmatpush1.msra.mxu0 %v44
    %876 = vmatprep.subr.mxu0 0.0
    %877 = vmatpush1.msra.mxu0 %v45
    %878 = vmatprep.subr.mxu0 0.0
    %879 = vmatpush1.msra.mxu0 %v46
    %880 = vmatprep.subr.mxu0 0.0
    %881 = vmatpush1.msra.mxu0 %v47
    %882 = vmatprep.subr.mxu0 0.0
    %883 = vmatpush1.msra.mxu0 0.0
    %884 = vmatprep.subr.mxu0 0.0
    %885 = vmatpush1.msra.mxu0 0.0
    %886 = vmatprep.subr.mxu0 0.0
    %887 = vmatpush1.msra.mxu0 0.0
    %888 = vmatprep.subr.mxu0 0.0
    %889 = vmatpush1.msra.mxu0 0.0
    %890 = vmatprep.subr.mxu0 0.0
    %891 = vmatpush1.msra.mxu0 0.0
    %892 = vmatprep.subr.mxu0 0.0
    %893 = vmatpush1.msra.mxu0 0.0
    %894 = vmatprep.subr.mxu0 0.0
    %895 = vmatpush1.msra.mxu0 0.0
    %896 = vmatprep.subr.mxu0 0.0
    %897 = vmatpush1.msra.mxu0 0.0
    %898 = vmatprep.subr.mxu0 0.0
    %899 = vmatpush1.msra.mxu0 0.0
    %900 = vmatprep.subr.mxu0 0.0
    %901 = vmatpush1.msra.mxu0 0.0
    %902 = vmatprep.subr.mxu0 0.0
    %903 = vmatpush1.msra.mxu0 0.0
    %904 = vmatprep.subr.mxu0 0.0
    %905 = vmatpush1.msra.mxu0 0.0
    %906 = vmatprep.subr.mxu0 0.0
    %907 = vmatpush1.msra.mxu0 0.0
    %908 = vmatprep.subr.mxu0 0.0
    %909 = vmatpush1.msra.mxu0 0.0
    %910 = vmatprep.subr.mxu0 0.0
    %911 = vmatpush1.msra.mxu0 0.0
    %912 = vmatprep.subr.mxu0 0.0
    %913 = vmatpush1.msra.mxu0 0.0
    %914 = vmatprep.subr.mxu0 0.0
    %915 = vmatpush1.msra.mxu0 0.0
    %916 = vmatprep.subr.mxu0 0.0
    %917 = vmatpush1.msra.mxu0 0.0
    %918 = vmatprep.subr.mxu0 0.0
    %919 = vmatpush1.msra.mxu0 0.0
    %920 = vmatprep.subr.mxu0 0.0
    %921 = vmatpush1.msra.mxu0 0.0
    %922 = vmatprep.subr.mxu0 0.0
    %923 = vmatpush1.msra.mxu0 0.0
    %924 = vmatprep.subr.mxu0 0.0
    %925 = vmatpush1.msra.mxu0 0.0
    %926 = vmatprep.subr.mxu0 0.0
    %927 = vmatpush1.msra.mxu0 0.0
    %928 = vmatprep.subr.mxu0 0.0
    %929 = vmatpush1.msra.mxu0 0.0
    %930 = vmatprep.subr.mxu0 0.0
    %931 = vmatpush1.msra.mxu0 0.0
    %932 = vmatprep.subr.mxu0 0.0
    %933 = vmatpush1.msra.mxu0 0.0
    %934 = vmatprep.subr.mxu0 0.0
    %935 = vmatpush1.msra.mxu0 0.0
    %936 = vmatprep.subr.mxu0 0.0
    %937 = vmatpush1.msra.mxu0 0.0
    %938 = vmatprep.mubr.f32.mxu0 0.0
    %939 = vmatmul.mubr.f32.gmra.mrb[0].mxu0 %v869
    %v940 = vpop.f32.mrb[0].mxu0
    %v941 = vadd.f32 %v867, %v940
    %v942 = vpop.f32.mrb[0].mxu0
    %943 = vmatprep.mubr.f32.mxu0 0.0
    %944 = vmatmul.mubr.f32.gmra.mrb[0].mxu0 %v872
    %v945 = vpop.f32.mrb[0].mxu0
    %v946 = vadd.f32 %v867, %v945
    %v947 = vpop.f32.mrb[0].mxu0
    %948 = vdwg.mxu0
    %v949 = vmax.f32 %v941, 0.0
    %v950 = vmax.f32 %v946, 0.0
    %v951 = vlaneseq
    %v952 = vshrl.u32 %v951, 7
    %v953 = vsub.s32 0, %v952
    %v954 = vrot.slane %v65, %v953
    %955 = vmatprep.subr.mxu0 0.0
    %956 = vmatpush1.msra.mxu0 %v48
    %957 = vmatprep.subr.mxu0 0.0
    %958 = vmatpush1.msra.mxu0 %v49
    %959 = vmatprep.subr.mxu0 0.0
    %960 = vmatpush1.msra.mxu0 %v50
    %961 = vmatprep.subr.mxu0 0.0
    %962 = vmatpush1.msra.mxu0 %v51
    %963 = vmatprep.subr.mxu0 0.0
    %964 = vmatpush1.msra.mxu0 %v52
    %965 = vmatprep.subr.mxu0 0.0
    %966 = vmatpush1.msra.mxu0 %v53
    %967 = vmatprep.subr.mxu0 0.0
    %968 = vmatpush1.msra.mxu0 %v54
    %969 = vmatprep.subr.mxu0 0.0
    %970 = vmatpush1.msra.mxu0 %v55
    %971 = vmatprep.subr.mxu0 0.0
    %972 = vmatpush1.msra.mxu0 %v56
    %973 = vmatprep.subr.mxu0 0.0
    %974 = vmatpush1.msra.mxu0 %v57
    %975 = vmatprep.subr.mxu0 0.0
    %976 = vmatpush1.msra.mxu0 %v58
    %977 = vmatprep.subr.mxu0 0.0
    %978 = vmatpush1.msra.mxu0 %v59
    %979 = vmatprep.subr.mxu0 0.0
    %980 = vmatpush1.msra.mxu0 %v60
    %981 = vmatprep.subr.mxu0 0.0
    %982 = vmatpush1.msra.mxu0 %v61
    %983 = vmatprep.subr.mxu0 0.0
    %984 = vmatpush1.msra.mxu0 %v62
    %985 = vmatprep.subr.mxu0 0.0
    %986 = vmatpush1.msra.mxu0 %v63
    %987 = vmatprep.subr.mxu0 0.0
    %988 = vmatpush1.msra.mxu0 0.0
    %989 = vmatprep.subr.mxu0 0.0
    %990 = vmatpush1.msra.mxu0 0.0
    %991 = vmatprep.subr.mxu0 0.0
    %992 = vmatpush1.msra.mxu0 0.0
    %993 = vmatprep.subr.mxu0 0.0
    %994 = vmatpush1.msra.mxu0 0.0
    %995 = vmatprep.subr.mxu0 0.0
    %996 = vmatpush1.msra.mxu0 0.0
    %997 = vmatprep.subr.mxu0 0.0
    %998 = vmatpush1.msra.mxu0 0.0
    %999 = vmatprep.subr.mxu0 0.0
    %1000 = vmatpush1.msra.mxu0 0.0
    %1001 = vmatprep.subr.mxu0 0.0
    %1002 = vmatpush1.msra.mxu0 0.0
    %1003 = vmatprep.subr.mxu0 0.0
    %1004 = vmatpush1.msra.mxu0 0.0
    %1005 = vmatprep.subr.mxu0 0.0
    %1006 = vmatpush1.msra.mxu0 0.0
    %1007 = vmatprep.subr.mxu0 0.0
    %1008 = vmatpush1.msra.mxu0 0.0
    %1009 = vmatprep.subr.mxu0 0.0
    %1010 = vmatpush1.msra.mxu0 0.0
    %1011 = vmatprep.subr.mxu0 0.0
    %1012 = vmatpush1.msra.mxu0 0.0
    %1013 = vmatprep.subr.mxu0 0.0
    %1014 = vmatpush1.msra.mxu0 0.0
    %1015 = vmatprep.subr.mxu0 0.0
    %1016 = vmatpush1.msra.mxu0 0.0
    %1017 = vmatprep.subr.mxu0 0.0
    %1018 = vmatpush1.msra.mxu0 0.0
    %1019 = vmatprep.mubr.f32.mxu0 0.0
    %1020 = vmatmul.mubr.f32.gmra.mrb[0].mxu0 %v949
    %v1021 = vpop.f32.mrb[0].mxu0
    %v1022 = vadd.f32 %v954, %v1021
    %v1023 = vpop.f32.mrb[0].mxu0
    %1024 = vmatprep.mubr.f32.mxu0 0.0
    %1025 = vmatmul.mubr.f32.gmra.mrb[0].mxu0 %v950
    %v1026 = vpop.f32.mrb[0].mxu0
    %v1027 = vadd.f32 %v954, %v1026
    %v1028 = vpop.f32.mrb[0].mxu0
    %1029 = vdwg.mxu0
    %v1030 = vadd.f32 %v814, %v1022
    %v1031 = vadd.f32 %v815, %v1027
    %1032 = vst.msk [vmem:[#allocation5] sm:$0xff] %vm66, %v1030
    %1033 = vst.msk [vmem:[#allocation5 + $0x8] sm:$0xff] %vm66, %v1031
    // Predicated region
    $region14: #{tpu_custom_call.1} parent=1 // pred_check
      _
    $region15: #{tpu_custom_call.1} parent=1 // pred_check_branch
      %1035 = sbr.rel (0) target = $region17
    $region16: #{tpu_custom_call.1} parent=1 // pred_region
      %s1037 = ssub.s32 256, 256
      %1038 = vsyncadd [#allocation4], %s1037
      %s1039 = sshll.u32 [#allocation5], 4
      %s1040 = int_to_ptr.vmem [resolvable:$true] %s1039
      %1045 = dma.vmem_to_hbm [thread:$0]  %s1040, 256, %s2, [#allocation4], 128, 128, 8
    $region17: #{tpu_custom_call.1} parent=1 // pred_fallthru
      _
    // Predicated region
    $region18: #{tpu_custom_call.1} parent=1 // pred_check
      _
    $region19: #{tpu_custom_call.1} parent=1 // pred_check_branch
      %1047 = sbr.rel (0) target = $region21
    $region20: #{tpu_custom_call.1} parent=1 // pred_region
      %1048 = dma.done [#allocation4], 256
    $region21: #{tpu_custom_call.1} parent=1 // pred_fallthru
      _
    %1049 = vsyncpa [#allocation3], 1
    %1050 = vsyncpa [#allocation4], 1

</llo_original>
